<compile_context>
chip_gen: v7x
topology: tpu7x:2x2x1
jax: 0.10.0
libtpu: 0.0.40
codegen_flags: <defaults>
</compile_context>

<pallas_src>
import functools

import jax
import jax.numpy as jnp
from jax.experimental import pallas as pl
from jax.experimental.pallas import tpu as pltpu


_TN_MAX = 2048  # max feature-chunk width (lanes); multiple of 128.


def _budgets():
    """(per-input block byte budget, vmem_limit_bytes), generation-aware."""
    vmem_cap = None
    try:
        info = pltpu.get_tpu_info()
        for name in ("vmem_capacity_bytes", "vmem_size_bytes", "vmem_bytes"):
            v = getattr(info, name, None)
            if v:
                vmem_cap = int(v)
                break
    except Exception:
        vmem_cap = None
    if vmem_cap is not None and vmem_cap >= 100 * 1024 * 1024:
        # v5e / v6e: 128 MiB VMEM -> bigger blocks, fewer grid steps.
        return 8 * 1024 * 1024, 96 * 1024 * 1024
    # v7x (64 MiB) or unknown: stay conservative (2 inputs x 2 buffers x 4 MiB).
    return 4 * 1024 * 1024, 48 * 1024 * 1024


def _pcc_kernel(lab_ref, pred_ref, out_ref,
                sx_ref, sy_ref, sxy_ref, sxx_ref, syy_ref,
                *, true_b, true_n, tb, tn, nk):
    """Grid = (row blocks, feature chunks). Writes per-row-block -sum(r)."""
    i = pl.program_id(0)   # row-block index
    k = pl.program_id(1)   # feature-chunk index (reduction axis)

    x = lab_ref[...].astype(jnp.float32)   # (tb, tn)
    y = pred_ref[...].astype(jnp.float32)  # (tb, tn)

    # Partial last feature chunk: zero the garbage lanes (select -> no NaN leak).
    if true_n % tn != 0:
        lane = k * tn + jax.lax.broadcasted_iota(jnp.int32, x.shape, 1)
        valid = lane < true_n
        x = jnp.where(valid, x, 0.0)
        y = jnp.where(valid, y, 0.0)

    # Per-row partial moments for this chunk (lane-axis reductions over sublanes).
    sx = jnp.sum(x, axis=-1, keepdims=True)       # (tb, 1)
    sy = jnp.sum(y, axis=-1, keepdims=True)
    sxy = jnp.sum(x * y, axis=-1, keepdims=True)
    sxx = jnp.sum(x * x, axis=-1, keepdims=True)
    syy = jnp.sum(y * y, axis=-1, keepdims=True)

    def finalize(Sx, Sy, Sxy, Sxx, Syy):
        n = jnp.float32(true_n)
        num = n * Sxy - Sx * Sy
        den = (n * Sxx - Sx * Sx) * (n * Syy - Sy * Sy)
        r = num * jax.lax.rsqrt(den)              # EUP rsqrt, single op
        # Partial last row block: drop garbage rows via select (NaN-safe).
        if true_b % tb != 0:
            row = i * tb + jax.lax.broadcasted_iota(jnp.int32, r.shape, 0)
            r = jnp.where(row < true_b, r, 0.0)
        out_ref[...] = (-jnp.sum(r)).reshape(1, 1)

    if nk == 1:
        # Single feature chunk: no scratch round-trip.
        finalize(sx, sy, sxy, sxx, syy)
    else:
        @pl.when(k == 0)
        def _init():
            sx_ref[...] = sx
            sy_ref[...] = sy
            sxy_ref[...] = sxy
            sxx_ref[...] = sxx
            syy_ref[...] = syy

        @pl.when(k > 0)
        def _accumulate():
            sx_ref[...] += sx
            sy_ref[...] += sy
            sxy_ref[...] += sxy
            sxx_ref[...] += sxx
            syy_ref[...] += syy

        @pl.when(k == nk - 1)
        def _finalize():
            finalize(sx_ref[...], sy_ref[...], sxy_ref[...],
                     sxx_ref[...], syy_ref[...])


def pcc_loss(labels: jax.Array, preds: jax.Array, *,
             tb: int | None = None, tn: int | None = None) -> jax.Array:
    """labels, preds: (B, N). Returns scalar f32 = -(1/B) * sum_i pearson_r_i."""
    B, N = labels.shape
    per_block_budget, vmem_limit = _budgets()

    # Feature-chunk width: full N if small, else a multiple-of-128 chunk.
    if tn is None:
        tn = N if N <= _TN_MAX else _TN_MAX
    tn = min(tn, N)
    if tn < N and tn % 128 != 0:
        raise ValueError("tn must be a multiple of 128 when tn < N")

    # Rows per block: fill the per-input byte budget, multiple of 8.
    if tb is None:
        tb = max(8, ((per_block_budget // (tn * 4)) // 8) * 8)
    if tb >= B:
        tb = B  # single row block; block dim == full array dim is always legal
    if tb < B and tb % 8 != 0:
        raise ValueError("tb must be a multiple of 8 when tb < B")

    nb = -(-B // tb)   # row blocks (partial last tile masked in-kernel; no pad)
    nk = -(-N // tn)   # feature chunks

    kernel = functools.partial(_pcc_kernel, true_b=B, true_n=N, tb=tb, tn=tn, nk=nk)

    partials = pl.pallas_call(
        kernel,
        out_shape=jax.ShapeDtypeStruct((nb, 1), jnp.float32),
        grid_spec=pltpu.PrefetchScalarGridSpec(
            num_scalar_prefetch=0,
            grid=(nb, nk),
            in_specs=[
                pl.BlockSpec((tb, tn), lambda i, k: (i, k)),
                pl.BlockSpec((tb, tn), lambda i, k: (i, k)),
            ],
            out_specs=pl.BlockSpec((1, 1), lambda i, k: (i, 0)),
            scratch_shapes=[pltpu.VMEM((tb, 1), jnp.float32)] * 5,
        ),
        compiler_params=pltpu.CompilerParams(
            # Row axis independent -> parallel (v7x can shard across its 2 TCs);
            # feature axis is a reduction -> arbitrary (and last in the grid).
            dimension_semantics=("parallel", "arbitrary"),
            vmem_limit_bytes=vmem_limit,
        ),
    )(labels, preds)

    # Final reduction + mean over the true batch size, in plain JAX.
    return jnp.sum(partials) / B


def _pcc_ref(labels, preds):
    """Pure-JAX reference (mirrors the PyTorch loop)."""
    def person_r(x, y):
        xm = x - jnp.mean(x)
        ym = y - jnp.mean(y)
        return jnp.sum(xm * ym) / (
            jnp.sqrt(jnp.sum(xm * xm)) * jnp.sqrt(jnp.sum(ym * ym))
        )

    B = labels.shape[0]
    total = 0.0
    for i in range(B):
        total = total - person_r(labels[i], preds[i])
    return total / B


if __name__ == "__main__":
    key = jax.random.PRNGKey(0)
    k1, k2, k3, k4, k5, k6 = jax.random.split(key, 6)

    # Case 1: small batch, single block (block == full array), single N chunk.
    B, N = 4, 128
    labels = jax.random.normal(k1, (B, N), dtype=jnp.float32)
    preds = 0.7 * labels + 0.3 * jax.random.normal(k2, (B, N), dtype=jnp.float32)
    out = jax.block_until_ready(pcc_loss(labels, preds))
    ref = jax.block_until_ready(_pcc_ref(labels, preds))
    assert jnp.allclose(out, ref, atol=1e-5, rtol=1e-4), (out, ref)

    # Case 2: multi-row-block grid with a partial last tile (no padding; the
    # in-kernel row mask discards the garbage rows).
    B2, N2 = 20, 256
    labels2 = jax.random.normal(k3, (B2, N2), dtype=jnp.float32)
    preds2 = 0.5 * labels2 + 0.5 * jax.random.normal(k4, (B2, N2), dtype=jnp.float32)
    out2 = jax.block_until_ready(pcc_loss(labels2, preds2, tb=8))
    ref2 = jax.block_until_ready(_pcc_ref(labels2, preds2))
    assert jnp.allclose(out2, ref2, atol=1e-5, rtol=1e-4), (out2, ref2)

    # Case 3: feature-axis chunking (nk > 1) with a partial last chunk
    # (lane masking) plus two exact row blocks -> exercises the scratch
    # accumulator and pl.when init/accumulate/finalize path.
    B3, N3 = 16, 300
    labels3 = jax.random.normal(k5, (B3, N3), dtype=jnp.float32)
    preds3 = 0.6 * labels3 + 0.4 * jax.random.normal(k6, (B3, N3), dtype=jnp.float32)
    out3 = jax.block_until_ready(pcc_loss(labels3, preds3, tb=8, tn=128))
    ref3 = jax.block_until_ready(_pcc_ref(labels3, preds3))
    assert jnp.allclose(out3, ref3, atol=1e-5, rtol=1e-4), (out3, ref3)

    # Case 4: bf16 inputs (DMA bytes halved; kernel accumulates in f32).
    labels4 = labels2.astype(jnp.bfloat16)
    preds4 = preds2.astype(jnp.bfloat16)
    out4 = jax.block_until_ready(pcc_loss(labels4, preds4, tb=8))
    ref4 = jax.block_until_ready(
        _pcc_ref(labels4.astype(jnp.float32), preds4.astype(jnp.float32)))
    assert jnp.allclose(out4, ref4, atol=1e-5, rtol=1e-4), (out4, ref4)

    print("KERNEL_OK")
</pallas_src>

<mosaic_0001>
module attributes {stable_mosaic.version = 11 : i64} {
  func.func @_pcc_kernel(%arg0: i32, %arg1: i32, %arg2: memref<4x128xf32, #tpu.memory_space<vmem>>, %arg3: memref<4x128xf32, #tpu.memory_space<vmem>>, %arg4: memref<1x1xf32, #tpu.memory_space<vmem>>, %arg5: memref<4x1xf32, #tpu.memory_space<vmem>>, %arg6: memref<4x1xf32, #tpu.memory_space<vmem>>, %arg7: memref<4x1xf32, #tpu.memory_space<vmem>>, %arg8: memref<4x1xf32, #tpu.memory_space<vmem>>, %arg9: memref<4x1xf32, #tpu.memory_space<vmem>>) attributes {dimension_semantics = [#tpu.dimension_semantics<parallel>, #tpu.dimension_semantics<arbitrary>], iteration_bounds = array<i64: 1, 1>, scalar_prefetch = 0 : i64, scratch_operands = 5 : i64, tpu.core_type = #tpu.core_type<tc>, window_params = [{transform_indices = @transform_0, window_bounds = array<i64: 4, 128>}, {transform_indices = @transform_1, window_bounds = array<i64: 4, 128>}, {transform_indices = @transform_2, window_bounds = array<i64: 1, 1>}]} {
    %c0 = arith.constant 0 : index
    %c0_0 = arith.constant 0 : index
    %0 = vector.load %arg2[%c0, %c0_0] : memref<4x128xf32, #tpu.memory_space<vmem>>, vector<4x128xf32>
    %c0_1 = arith.constant 0 : index
    %c0_2 = arith.constant 0 : index
    %1 = vector.load %arg3[%c0_1, %c0_2] : memref<4x128xf32, #tpu.memory_space<vmem>>, vector<4x128xf32>
    %cst = arith.constant dense<0.000000e+00> : vector<4xf32>
    %2 = vector.multi_reduction <add>, %0, %cst [1] : vector<4x128xf32> to vector<4xf32>
    %3 = vector.shape_cast %2 : vector<4xf32> to vector<4x1xf32>
    %cst_3 = arith.constant dense<0.000000e+00> : vector<4xf32>
    %4 = vector.multi_reduction <add>, %1, %cst_3 [1] : vector<4x128xf32> to vector<4xf32>
    %5 = vector.shape_cast %4 : vector<4xf32> to vector<4x1xf32>
    %6 = arith.mulf %0, %1 : vector<4x128xf32>
    %cst_4 = arith.constant dense<0.000000e+00> : vector<4xf32>
    %7 = vector.multi_reduction <add>, %6, %cst_4 [1] : vector<4x128xf32> to vector<4xf32>
    %8 = vector.shape_cast %7 : vector<4xf32> to vector<4x1xf32>
    %9 = arith.mulf %0, %0 : vector<4x128xf32>
    %cst_5 = arith.constant dense<0.000000e+00> : vector<4xf32>
    %10 = vector.multi_reduction <add>, %9, %cst_5 [1] : vector<4x128xf32> to vector<4xf32>
    %11 = vector.shape_cast %10 : vector<4xf32> to vector<4x1xf32>
    %12 = arith.mulf %1, %1 : vector<4x128xf32>
    %cst_6 = arith.constant dense<0.000000e+00> : vector<4xf32>
    %13 = vector.multi_reduction <add>, %12, %cst_6 [1] : vector<4x128xf32> to vector<4xf32>
    %14 = vector.shape_cast %13 : vector<4xf32> to vector<4x1xf32>
    %cst_7 = arith.constant 1.280000e+02 : f32
    %15 = vector.broadcast %cst_7 : f32 to vector<4x1xf32>
    %16 = arith.mulf %15, %8 : vector<4x1xf32>
    %17 = arith.mulf %3, %5 : vector<4x1xf32>
    %18 = arith.subf %16, %17 : vector<4x1xf32>
    %cst_8 = arith.constant 1.280000e+02 : f32
    %19 = vector.broadcast %cst_8 : f32 to vector<4x1xf32>
    %20 = arith.mulf %19, %11 : vector<4x1xf32>
    %21 = arith.mulf %3, %3 : vector<4x1xf32>
    %22 = arith.subf %20, %21 : vector<4x1xf32>
    %cst_9 = arith.constant 1.280000e+02 : f32
    %23 = vector.broadcast %cst_9 : f32 to vector<4x1xf32>
    %24 = arith.mulf %23, %14 : vector<4x1xf32>
    %25 = arith.mulf %5, %5 : vector<4x1xf32>
    %26 = arith.subf %24, %25 : vector<4x1xf32>
    %27 = arith.mulf %22, %26 : vector<4x1xf32>
    %28 = math.rsqrt %27 : vector<4x1xf32>
    %29 = arith.mulf %18, %28 : vector<4x1xf32>
    %30 = vector.shape_cast %29 : vector<4x1xf32> to vector<1x4x1xf32>
    %cst_10 = arith.constant dense<0.000000e+00> : vector<1xf32>
    %31 = vector.multi_reduction <add>, %30, %cst_10 [1, 2] : vector<1x4x1xf32> to vector<1xf32>
    %32 = vector.shape_cast %31 : vector<1xf32> to vector<1x1x1xf32>
    %33 = vector.extract %32[0, 0, 0] : f32 from vector<1x1x1xf32>
    %cst_11 = arith.constant 0.000000e+00 : f32
    %34 = arith.subf %cst_11, %33 : f32
    %35 = vector.broadcast %34 : f32 to vector<1x1xf32>
    %c0_12 = arith.constant 0 : index
    %c0_13 = arith.constant 0 : index
    %36 = vector.load %arg4[%c0_12, %c0_13] : memref<1x1xf32, #tpu.memory_space<vmem>>, vector<1x1xf32>
    tpu.vector_store %arg4[%c0_12, %c0_13], %35 {strides = array<i32>} : memref<1x1xf32, #tpu.memory_space<vmem>>, vector<1x1xf32>,
    return
  }
  func.func @transform_0(%arg0: i32, %arg1: i32) -> (i32, i32) {
    %c0_i32 = arith.constant 0 : i32
    return %arg0, %arg1 : i32, i32
  }
  func.func @transform_1(%arg0: i32, %arg1: i32) -> (i32, i32) {
    %c0_i32 = arith.constant 0 : i32
    return %arg0, %arg1 : i32, i32
  }
  func.func @transform_2(%arg0: i32, %arg1: i32) -> (i32, i32) {
    %c0_i32 = arith.constant 0 : i32
    %c0_i32_0 = arith.constant 0 : i32
    return %arg0, %c0_i32 : i32, i32
  }
}

</mosaic_0001>

<llo_original>
// kernel: tpu_custom_call.1
$region0: #{tpu_custom_call.1}
  #allocation0 [shape = 'u32[]', space=smem, size = 0x4, offset = 0x4, fixed_abs, tag = 'smem constant byte address 0x4 - core index']
  #allocation1 [shape = 'u32[144,128]{1,0:T(1,128)}', space=vmem, size = 0x12000, scoped, tag = 'internal scratch']
  #allocation2 [shape = 'f32[4,1]{1,0:T(4,128)}', space=vmem, size = 0x800, scoped, tag = 'scratch operand']
  #allocation3 [shape = 'f32[4,1]{1,0:T(4,128)}', space=vmem, size = 0x800, scoped, tag = 'scratch operand']
  #allocation4 [shape = 'f32[4,1]{1,0:T(4,128)}', space=vmem, size = 0x800, scoped, tag = 'scratch operand']
  #allocation5 [shape = 'f32[4,1]{1,0:T(4,128)}', space=vmem, size = 0x800, scoped, tag = 'scratch operand']
  #allocation6 [shape = 'f32[4,1]{1,0:T(4,128)}', space=vmem, size = 0x800, scoped, tag = 'scratch operand']
  %s0 = inlined_call_operand.hbm [shape: f32[4,128], index: 0, kind: input, shape index: {}]
  %s1 = inlined_call_operand.hbm [shape: f32[4,128], index: 1, kind: input, shape index: {}]
  %s2 = inlined_call_operand.hbm [shape: f32[1,1], index: 2, kind: output, shape index: {}]
  %s3 = sld [smem:[#allocation0]]
  $region26: #{tpu_custom_call.1} parent=0
    _
  %s5 = ssub.s32 1, %s3
  %s6 = scalar_select 0, %s5, %s3
  $region1: #{tpu_custom_call.1} parent=0
    #allocation7 [shape = 'u8[2048]{0}', space=vmem, size = 0x800, scoped, tag = 'input window, operand 0, single buffered']
    #allocation8 [shape = 's32[1]{0}', space=sflag, size = 0x4, scoped, tag = 'scoped memory for tpu_custom_call.1']
    #allocation9 [shape = 's32[1]{0}', space=sflag, size = 0x4, scoped, tag = 'scoped memory for tpu_custom_call.1']
    #allocation10 [shape = 'u8[2048]{0}', space=vmem, size = 0x800, scoped, tag = 'input window, operand 1, single buffered']
    #allocation11 [shape = 's32[1]{0}', space=sflag, size = 0x4, scoped, tag = 'scoped memory for tpu_custom_call.1']
    #allocation12 [shape = 'u8[512]{0}', space=vmem, size = 0x400, scoped, tag = 'output window, operand 0, single buffered']
    %7 = vsyncpa [#allocation8], 0
    %8 = vsyncpa [#allocation11], 0
    %9 = vsyncpa [#allocation9], 0
    // Predicated region
    $region2: #{tpu_custom_call.1} parent=1 // pred_check
      _
    $region3: #{tpu_custom_call.1} parent=1 // pred_check_branch
      %11 = sbr.rel (0) target = $region5
    $region4: #{tpu_custom_call.1} parent=1 // pred_region
      %s13 = ssub.s32 64, 64
      %14 = vsyncadd [#allocation8], %s13
      %s16 = sshll.u32 [#allocation7], 4
      %s17 = int_to_ptr.vmem [resolvable:$true] %s16
      %19 = dma.hbm_to_vmem [thread:$0]  %s0, 64, %s17, [#allocation8]
    $region5: #{tpu_custom_call.1} parent=1 // pred_fallthru
      _
    // Predicated region
    $region6: #{tpu_custom_call.1} parent=1 // pred_check
      _
    $region7: #{tpu_custom_call.1} parent=1 // pred_check_branch
      %21 = sbr.rel (0) target = $region9
    $region8: #{tpu_custom_call.1} parent=1 // pred_region
      %s23 = ssub.s32 64, 64
      %24 = vsyncadd [#allocation11], %s23
      %s26 = sshll.u32 [#allocation10], 4
      %s27 = int_to_ptr.vmem [resolvable:$true] %s26
      %29 = dma.hbm_to_vmem [thread:$0]  %s1, 64, %s27, [#allocation11]
    $region9: #{tpu_custom_call.1} parent=1 // pred_fallthru
      _
    // Predicated region
    $region10: #{tpu_custom_call.1} parent=1 // pred_check
      _
    $region11: #{tpu_custom_call.1} parent=1 // pred_check_branch
      %31 = sbr.rel (0) target = $region13
    $region12: #{tpu_custom_call.1} parent=1 // pred_region
      %32 = dma.done [#allocation8], 64
    $region13: #{tpu_custom_call.1} parent=1 // pred_fallthru
      _
    // Predicated region
    $region14: #{tpu_custom_call.1} parent=1 // pred_check
      _
    $region15: #{tpu_custom_call.1} parent=1 // pred_check_branch
      %34 = sbr.rel (0) target = $region17
    $region16: #{tpu_custom_call.1} parent=1 // pred_region
      %35 = dma.done [#allocation11], 64
    $region17: #{tpu_custom_call.1} parent=1 // pred_fallthru
      _
    %v36 = vld [vmem:[#allocation7] sm:$0xf]
    %v37 = vld [vmem:[#allocation10] sm:$0xf]
    %vm38 = vcmask 1043456
    %v39 = vsel %vm38, %v36, 0.0
    %40 = vadd.xlane.f32.xlu0 %v39
    %v41 = vpop.xlane.xlu0 %40
    %v42 = vsel %vm38, %v37, 0.0
    %43 = vadd.xlane.f32.xlu0 %v42
    %v44 = vpop.xlane.xlu0 %43
    %v45 = vmul.f32 %v36, %v37
    %v46 = vsel %vm38, %v45, 0.0
    %47 = vadd.xlane.f32.xlu0 %v46
    %v48 = vpop.xlane.xlu0 %47
    %v49 = vmul.f32 %v36, %v36
    %v50 = vsel %vm38, %v49, 0.0
    %51 = vadd.xlane.f32.xlu0 %v50
    %v52 = vpop.xlane.xlu0 %51
    %v53 = vmul.f32 %v37, %v37
    %v54 = vsel %vm38, %v53, 0.0
    %55 = vadd.xlane.f32.xlu0 %v54
    %v56 = vpop.xlane.xlu0 %55
    %v57 = vmul.f32 %v48, 128.0
    %v58 = vmul.f32 %v41, %v44
    %v59 = vsub.f32 %v57, %v58
    %v60 = vmul.f32 %v52, 128.0
    %v61 = vmul.f32 %v41, %v41
    %v62 = vsub.f32 %v60, %v61
    %v63 = vmul.f32 %v56, 128.0
    %v64 = vmul.f32 %v44, %v44
    %v65 = vsub.f32 %v63, %v64
    %v66 = vmul.f32 %v62, %v65
    %v67 = vrsqrt.pop %v66
    %v68 = vmul.f32 %v59, %v67
    %vm69 = vcmask 3072
    %v70 = vsel %vm69, %v68, 0.0
    %71 = vadd.xlane.f32.xlu0 %v70
    %v72 = vpop.xlane.xlu0 %71
    %v73 = vrot.slane %v72, 4
    %v74 = vadd.f32 %v72, %v73
    %v75 = vrot.slane %v74, 2
    %v76 = vadd.f32 %v74, %v75
    %v77 = vrot.slane %v76, 1
    %v78 = vadd.f32 %v76, %v77
    %s79 = vtos %v78
    %s80 = ssub.f32 0.0, %s79
    %v81 = vstv %s80
    %vm82 = vcmask 0
    %83 = vst.msk [vmem:[#allocation12] sm:$0x1] %vm82, %v81
    // Predicated region
    $region18: #{tpu_custom_call.1} parent=1 // pred_check
      _
    $region19: #{tpu_custom_call.1} parent=1 // pred_check_branch
      %85 = sbr.rel (0) target = $region21
    $region20: #{tpu_custom_call.1} parent=1 // pred_region
      %s87 = ssub.s32 16, 16
      %88 = vsyncadd [#allocation9], %s87
      %s90 = sshll.u32 [#allocation12], 4
      %s91 = int_to_ptr.vmem [resolvable:$true] %s90
      %93 = dma.vmem_to_hbm [thread:$0]  %s91, 16, %s2, [#allocation9]
    $region21: #{tpu_custom_call.1} parent=1 // pred_fallthru
      _
    // Predicated region
    $region22: #{tpu_custom_call.1} parent=1 // pred_check
      _
    $region23: #{tpu_custom_call.1} parent=1 // pred_check_branch
      %95 = sbr.rel (0) target = $region25
    $region24: #{tpu_custom_call.1} parent=1 // pred_region
      %96 = dma.done [#allocation9], 16
    $region25: #{tpu_custom_call.1} parent=1 // pred_fallthru
      _
    %97 = vsyncpa [#allocation8], 1
    %98 = vsyncpa [#allocation11], 1
    %99 = vsyncpa [#allocation9], 1

</llo_original>
